<compile_context>
chip_gen: v7x
topology: tpu7x:2x2x1
jax: 0.10.0
libtpu: 0.0.40
codegen_flags: <defaults>
</compile_context>

<pallas_src>
import functools
import math

import jax
import jax.numpy as jnp
from jax.experimental import pallas as pl
from jax.experimental.pallas import tpu as pltpu


# ---------------------------------------------------------------------------
# pltpu.roll sign-convention probe (tiny one-off kernel, cached).  The conv
# taps are direction-sensitive, so we verify at runtime whether
# pltpu.roll(x, s)[i] == x[i - s] (np.roll convention) before tracing the
# main kernel, instead of baking in an assumption.
# ---------------------------------------------------------------------------
_ROLL_IS_NUMPY = None


def _roll_follows_numpy():
    global _ROLL_IS_NUMPY
    if _ROLL_IS_NUMPY is None:
        def probe(x_ref, o_ref):
            o_ref[...] = pltpu.roll(x_ref[...], 1, axis=1)

        x = jax.lax.broadcasted_iota(jnp.float32, (8, 128), 1)
        y = pl.pallas_call(
            probe, out_shape=jax.ShapeDtypeStruct((8, 128), jnp.float32))(x)
        _ROLL_IS_NUMPY = bool(jax.device_get(y)[0, 1] == 0.0)
    return _ROLL_IS_NUMPY


# ---------------------------------------------------------------------------
# Fused Refine kernel.  Activations are (C, L) f32 slabs with
# L = images_per_block * H * W lanes (batch folded into lanes).
# ---------------------------------------------------------------------------
def _refine_kernel(geom_ref, f_ref, pm_ref,
                   w0_ref, b0_ref, w1_ref, b1_ref, w2_ref, b2_ref,
                   w3_ref, b3_ref, w4_ref, b4_ref,
                   o_ref, *, W, cdt, roll_is_numpy):
    L = f_ref.shape[-1]

    geom = geom_ref[...]                       # (10, L) f32, built in wrapper
    col_nf, col_nl = geom[0:1], geom[1:2]      # dx = -1 / +1 tap validity
    row_nf, row_nl = geom[2:3], geom[3:4]      # dy = -1 / +1 tap validity
    wxc, wxl, wxr = geom[4:5], geom[5:6], geom[6:7]   # x-direction blend wts
    wyc, wyu, wyd = geom[7:8], geom[8:9], geom[9:10]  # y-direction blend wts

    def read(x, d):
        # y[:, q] = x[:, q + d] via an XLU lane rotate; wrapped values are
        # always killed by a mask / zero blend weight at the call site.
        s = (-d) % L if roll_is_numpy else d % L
        return pltpu.roll(x, s, axis=1)

    def conv3x3(x, w_ref, b_ref, relu_input):
        # 3x3 'same' conv on a (Cin, L) slab.  The column masks also stop any
        # leakage between the images packed side-by-side in the lane axis.
        # At tiny channel counts these dots underutilize the MXU; the layout
        # targets production planes (K = Cin fills the MXU K dimension).
        xr = jnp.maximum(x, 0.0) if relu_input else x
        variants = (
            (read(xr, -1) * col_nf).astype(cdt),   # taps with dx = -1
            xr.astype(cdt),                        # taps with dx =  0
            (read(xr, +1) * col_nl).astype(cdt),   # taps with dx = +1
        )
        partial = []
        for idy in range(3):                       # dy = idy - 1
            acc = None
            for idx in range(3):                   # dx = idx - 1
                d = jnp.dot(w_ref[idy * 3 + idx], variants[idx],
                            preferred_element_type=jnp.float32)
                acc = d if acc is None else acc + d
            partial.append(acc)                    # (Cout, L) f32
        out = (partial[1]
               + read(partial[0], -W) * row_nf     # contribution of dy = -1
               + read(partial[2], +W) * row_nl)    # contribution of dy = +1
        return out + b_ref[...]

    f = f_ref[...]

    # convFS -> ResFS
    s0 = conv3x3(f, w0_ref, b0_ref, relu_input=False)
    r = conv3x3(s0, w1_ref, b1_ref, relu_input=True)
    s = s0 + conv3x3(r, w2_ref, b2_ref, relu_input=True)

    # Bilinear x2 upsample (align_corners=False) of pm, applied as a
    # separable 4-tap blend on the NN-replicated slab pmE (pure VPU/XLU).
    pmE = pm_ref[...]
    ux = wxc * pmE + wxl * read(pmE, -2) + wxr * read(pmE, +2)
    up = wyc * ux + wyu * read(ux, -2 * W) + wyd * read(ux, +2 * W)

    # + upsample, then ResMM
    m0 = s + up
    r2 = conv3x3(m0, w3_ref, b3_ref, relu_input=True)
    m = m0 + conv3x3(r2, w4_ref, b4_ref, relu_input=True)

    o_ref[...] = m.astype(o_ref.dtype)


# ---------------------------------------------------------------------------
# Parameters (synthetic, deterministic).  Canonical conv weight layout is
# (ky, kx, Cin, Cout); the equivalent torch weight is w_torch[co, ci, ky, kx].
# ---------------------------------------------------------------------------
def make_conv_params(key, cin, cout, scale=0.1):
    kw, kb = jax.random.split(key)
    w = jax.random.normal(kw, (3, 3, cin, cout), jnp.float32) * scale
    b = jax.random.normal(kb, (cout,), jnp.float32) * scale
    return w, b


def make_refine_params(key, inplanes, planes):
    ks = jax.random.split(key, 5)
    return {
        "convFS": make_conv_params(ks[0], inplanes, planes),
        "ResFS_conv1": make_conv_params(ks[1], planes, planes),
        "ResFS_conv2": make_conv_params(ks[2], planes, planes),
        "ResMM_conv1": make_conv_params(ks[3], planes, planes),
        "ResMM_conv2": make_conv_params(ks[4], planes, planes),
    }


_PARAM_ORDER = ("convFS", "ResFS_conv1", "ResFS_conv2",
                "ResMM_conv1", "ResMM_conv2")


def pack_refine_params(params, compute_dtype=jnp.bfloat16):
    """(3,3,Cin,Cout) -> (9, Cout, Cin) tap-major matrices in the MXU compute
    dtype; biases -> (Cout, 1) f32.  Called ONCE, outside the jitted forward."""
    packed = []
    for name in _PARAM_ORDER:
        w, b = params[name]
        cin, cout = w.shape[2], w.shape[3]
        wm = jnp.transpose(w, (0, 1, 3, 2)).reshape(9, cout, cin)
        packed.append(wm.astype(compute_dtype))
        packed.append(b.reshape(cout, 1).astype(jnp.float32))
    return tuple(packed)


# ---------------------------------------------------------------------------
# Per-position masks / bilinear blend weights (built wrapper-side so the
# kernel needs no integer div/mod; periodic per image, tiled to the block).
# ---------------------------------------------------------------------------
def _geometry_rows(H, W, nb):
    HW = H * W
    x = jnp.arange(HW, dtype=jnp.int32) % W
    y = jnp.arange(HW, dtype=jnp.int32) // W
    col_nf = x != 0
    col_nl = x != (W - 1)
    row_nf = y != 0
    row_nl = y != (H - 1)
    x_even = (x % 2) == 0
    y_even = (y % 2) == 0
    f32 = jnp.float32
    wxl = 0.25 * (x_even & col_nf).astype(f32)
    wxr = 0.25 * ((~x_even) & col_nl).astype(f32)
    wxc = 1.0 - wxl - wxr          # 0.75 in the interior, 1.0 at clamped edges
    wyu = 0.25 * (y_even & row_nf).astype(f32)
    wyd = 0.25 * ((~y_even) & row_nl).astype(f32)
    wyc = 1.0 - wyu - wyd
    rows = jnp.stack([col_nf.astype(f32), col_nl.astype(f32),
                      row_nf.astype(f32), row_nl.astype(f32),
                      wxc, wxl, wxr, wyc, wyu, wyd], axis=0)
    return jnp.tile(rows, (1, nb))                      # (10, nb*HW)


# ---------------------------------------------------------------------------
# Refine.forward (NCHW in / NCHW out) via the single fused Pallas kernel.
# ---------------------------------------------------------------------------
@functools.partial(jax.jit, static_argnames=("images_per_block", "roll_is_numpy"))
def _refine_forward_impl(f, pm, packed, *, images_per_block, roll_is_numpy):
    N, Cin, H, W = f.shape
    Np, P, Hp, Wp = pm.shape
    assert Np == N and H == 2 * Hp and W == 2 * Wp
    HW = H * W
    nb = images_per_block
    assert N % nb == 0
    G = N // nb
    L = nb * HW
    cdt = packed[0].dtype

    # Channel-major lane-dense slabs (batch folded into lanes).  These
    # transposes are wrapper-side layout plumbing fused by XLA under jit.
    f_cm = jnp.transpose(f.reshape(N, Cin, HW), (1, 0, 2)).reshape(Cin, N * HW)
    # Nearest-neighbour x2 replication of pm; the kernel's 4-tap blend turns
    # it into the exact align_corners=False bilinear result.
    pmE = jnp.repeat(jnp.repeat(pm, 2, axis=2), 2, axis=3).reshape(N, P, HW)
    pm_cm = jnp.transpose(pmE, (1, 0, 2)).reshape(P, N * HW)

    geom = _geometry_rows(H, W, nb)                     # (10, L)

    kernel = functools.partial(_refine_kernel, W=W, cdt=cdt,
                               roll_is_numpy=roll_is_numpy)

    lane_block = lambda g: (0, g)
    const2 = lambda g: (0, 0)
    const3 = lambda g: (0, 0, 0)

    in_specs = [pl.BlockSpec((10, L), const2),          # masks / blend weights
                pl.BlockSpec((Cin, L), lane_block),     # f slab
                pl.BlockSpec((P, L), lane_block)]       # NN-replicated pm slab
    for i in range(len(_PARAM_ORDER)):
        w = packed[2 * i]
        in_specs.append(pl.BlockSpec(w.shape, const3))          # (9, Cout, Cin)
        in_specs.append(pl.BlockSpec((w.shape[1], 1), const2))  # (Cout, 1) bias

    # Advisory cost model + explicit VMEM budget (review items).
    conv_flops = 2 * 9 * (Cin * P + 4 * P * P) * (N * HW)
    up_flops = 12 * P * N * HW
    weight_bytes = sum(int(a.size) * a.dtype.itemsize for a in packed)
    bytes_accessed = 4 * (Cin + 2 * P + 10) * N * HW + weight_bytes
    cost = pl.CostEstimate(flops=conv_flops + up_flops, transcendentals=0,
                           bytes_accessed=bytes_accessed)

    # Rough per-block footprint (activations dominate) with generous headroom,
    # kept below every generation's physical VMEM at these shapes.
    est = 4 * (Cin + 8 * max(P, 8) + 16) * L * 4 + 4 * weight_bytes
    vmem_limit = int(min(max(est, 8 * 2**20), 32 * 2**20))

    out_cm = pl.pallas_call(
        kernel,
        out_shape=jax.ShapeDtypeStruct((P, N * HW), jnp.float32),
        grid_spec=pltpu.PrefetchScalarGridSpec(
            num_scalar_prefetch=0,
            grid=(G,),
            in_specs=in_specs,
            out_specs=pl.BlockSpec((P, L), lane_block),
        ),
        compiler_params=pltpu.CompilerParams(
            dimension_semantics=("parallel",),
            vmem_limit_bytes=vmem_limit),
        cost_estimate=cost,
    )(geom, f_cm, pm_cm, *packed)

    return jnp.transpose(out_cm.reshape(P, N, HW), (1, 0, 2)).reshape(N, P, H, W)


def refine_forward(f, pm, packed, *, images_per_block=2):
    nb = math.gcd(f.shape[0], max(1, images_per_block))
    return _refine_forward_impl(f, pm, packed, images_per_block=nb,
                                roll_is_numpy=_roll_follows_numpy())


# ---------------------------------------------------------------------------
# Plain-JAX NCHW reference.  `qdt` optionally rounds the matmul inputs
# (activations + weights) the same way the kernel does, so the structural
# check can use a tight tolerance independent of bf16 rounding.
# ---------------------------------------------------------------------------
def _quantize(x, dtype):
    return x.astype(dtype).astype(jnp.float32) if dtype is not None else x


def ref_conv3x3(x, w_kkio, b, qdt=None):
    N, C, H, W = x.shape
    cout = w_kkio.shape[-1]
    xq = _quantize(x, qdt)
    wq = _quantize(w_kkio, qdt)
    xp = jnp.pad(xq, ((0, 0), (0, 0), (1, 1), (1, 1)))
    acc = jnp.zeros((N, cout, H, W), jnp.float32)
    for ky in range(3):
        for kx in range(3):
            patch = xp[:, :, ky:ky + H, kx:kx + W]
            acc = acc + jnp.einsum('nchw,co->nohw', patch, wq[ky, kx],
                                   precision=jax.lax.Precision.HIGHEST)
    return acc + b[None, :, None, None]


def ref_upsample_x2(x):
    N, C, H, W = x.shape

    def idx(out_size, in_size):
        i = jnp.arange(out_size, dtype=jnp.float32)
        src = (i + 0.5) / 2.0 - 0.5
        left = jnp.floor(src)
        frac = src - left
        i0 = jnp.clip(left, 0, in_size - 1).astype(jnp.int32)
        i1 = jnp.clip(left + 1, 0, in_size - 1).astype(jnp.int32)
        return i0, i1, frac

    h0, h1, hf = idx(2 * H, H)
    w0, w1, wf = idx(2 * W, W)
    xh = (x[:, :, h0, :] * (1.0 - hf)[None, None, :, None]
          + x[:, :, h1, :] * hf[None, None, :, None])
    return xh[:, :, :, w0] * (1.0 - wf) + xh[:, :, :, w1] * wf


def ref_refine(f, pm, params, qdt=None):
    s0 = ref_conv3x3(f, *params["convFS"], qdt=qdt)
    r = ref_conv3x3(jnp.maximum(s0, 0.0), *params["ResFS_conv1"], qdt=qdt)
    s = s0 + ref_conv3x3(jnp.maximum(r, 0.0), *params["ResFS_conv2"], qdt=qdt)
    m0 = s + ref_upsample_x2(pm)
    r2 = ref_conv3x3(jnp.maximum(m0, 0.0), *params["ResMM_conv1"], qdt=qdt)
    return m0 + ref_conv3x3(jnp.maximum(r2, 0.0), *params["ResMM_conv2"], qdt=qdt)


if __name__ == "__main__":
    N = 4               # folded 2 images/lane-block -> grid=(2,) parallel
    inplanes = 8
    planes = 4
    H = W = 16          # f spatial size
    Hp = Wp = 8         # pm spatial size (x2 bilinear -> 16x16)

    key = jax.random.PRNGKey(0)
    k_f, k_pm, k_par = jax.random.split(key, 3)
    f = jax.random.normal(k_f, (N, inplanes, H, W), jnp.float32)
    pm = jax.random.normal(k_pm, (N, planes, Hp, Wp), jnp.float32)
    params = make_refine_params(k_par, inplanes, planes)

    packed = pack_refine_params(params, compute_dtype=jnp.bfloat16)
    out = jax.block_until_ready(refine_forward(f, pm, packed, images_per_block=2))
    assert out.shape == (N, planes, H, W), out.shape

    # Structural check: reference rounds matmul inputs to bf16 at exactly the
    # same points as the kernel, so the remaining differences are only f32
    # accumulation-order noise -> a tight tolerance that catches any
    # tap-indexing / weight-packing / roll-direction / mask bug.
    ref_bf16 = jax.block_until_ready(ref_refine(f, pm, params, qdt=jnp.bfloat16))
    err_tight = float(jnp.max(jnp.abs(out - ref_bf16)))
    assert err_tight < 2e-3, f"structural max abs err vs bf16 reference: {err_tight}"

    # Numerical sanity vs the exact f32 module: deviation must be explained by
    # the (quantified) bf16 input rounding alone.
    ref_f32 = jax.block_until_ready(ref_refine(f, pm, params))
    err_f32 = float(jnp.max(jnp.abs(out - ref_f32)))
    bf16_drift = float(jnp.max(jnp.abs(ref_bf16 - ref_f32)))
    assert err_f32 <= bf16_drift + 5e-3, (
        f"drift vs f32 reference {err_f32} exceeds bf16 rounding bound "
        f"{bf16_drift + 5e-3}")

    print("KERNEL_OK")
</pallas_src>

<mosaic_0001>
module attributes {stable_mosaic.version = 11 : i64} {
  func.func @probe(%arg0: memref<8x128xf32, #tpu.memory_space<vmem>>, %arg1: memref<8x128xf32, #tpu.memory_space<vmem>>) attributes {dimension_semantics = [], scalar_prefetch = 0 : i64, scratch_operands = 0 : i64, tpu.core_type = #tpu.core_type<tc>} {
    %c0 = arith.constant 0 : index
    %c0_0 = arith.constant 0 : index
    %0 = vector.load %arg0[%c0, %c0_0] : memref<8x128xf32, #tpu.memory_space<vmem>>, vector<8x128xf32>
    %c1_i32 = arith.constant 1 : i32
    %1 = tpu.dynamic_rotate %0 by %c1_i32 dim 1 : vector<8x128xf32>, i32 -> vector<8x128xf32>
    %c0_1 = arith.constant 0 : index
    %c0_2 = arith.constant 0 : index
    %2 = vector.load %arg1[%c0_1, %c0_2] : memref<8x128xf32, #tpu.memory_space<vmem>>, vector<8x128xf32>
    tpu.vector_store %arg1[%c0_1, %c0_2], %1 {strides = array<i32>} : memref<8x128xf32, #tpu.memory_space<vmem>>, vector<8x128xf32>,
    return
  }
}

</mosaic_0001>

<llo_original>
// kernel: tpu_custom_call.1
$region0: #{tpu_custom_call.1}
  #allocation0 [shape = 'u32[]', space=smem, size = 0x4, offset = 0x4, fixed_abs, tag = 'smem constant byte address 0x4 - core index']
  #allocation1 [shape = 'u32[144,128]{1,0:T(1,128)}', space=vmem, size = 0x12000, scoped, tag = 'internal scratch']
  %s0 = inlined_call_operand.hbm [shape: f32[8,128], index: 0, kind: input, shape index: {}]
  %s1 = inlined_call_operand.hbm [shape: f32[8,128], index: 1, kind: output, shape index: {}]
  %s2 = sld [smem:[#allocation0]]
  $region18: #{tpu_custom_call.1} parent=0
    _
  %s4 = ssub.s32 1, %s2
  %s5 = scalar_select 0, %s4, %s2
  $region1: #{tpu_custom_call.1} parent=0
    #allocation2 [shape = 'u8[4096]{0}', space=vmem, size = 0x1000, scoped, tag = 'input window, operand 0, single buffered']
    #allocation3 [shape = 's32[1]{0}', space=sflag, size = 0x4, scoped, tag = 'scoped memory for tpu_custom_call.1']
    #allocation4 [shape = 's32[1]{0}', space=sflag, size = 0x4, scoped, tag = 'scoped memory for tpu_custom_call.1']
    #allocation5 [shape = 'u8[4096]{0}', space=vmem, size = 0x1000, scoped, tag = 'output window, operand 0, single buffered']
    %6 = vsyncpa [#allocation3], 0
    %7 = vsyncpa [#allocation4], 0
    // Predicated region
    $region2: #{tpu_custom_call.1} parent=1 // pred_check
      _
    $region3: #{tpu_custom_call.1} parent=1 // pred_check_branch
      %9 = sbr.rel (0) target = $region5
    $region4: #{tpu_custom_call.1} parent=1 // pred_region
      %s11 = ssub.s32 128, 128
      %12 = vsyncadd [#allocation3], %s11
      %s14 = sshll.u32 [#allocation2], 4
      %s15 = int_to_ptr.vmem [resolvable:$true] %s14
      %17 = dma.hbm_to_vmem [thread:$0]  %s0, 128, %s15, [#allocation3]
    $region5: #{tpu_custom_call.1} parent=1 // pred_fallthru
      _
    // Predicated region
    $region6: #{tpu_custom_call.1} parent=1 // pred_check
      _
    $region7: #{tpu_custom_call.1} parent=1 // pred_check_branch
      %19 = sbr.rel (0) target = $region9
    $region8: #{tpu_custom_call.1} parent=1 // pred_region
      %20 = dma.done [#allocation3], 128
    $region9: #{tpu_custom_call.1} parent=1 // pred_fallthru
      _
    %v21 = vld [vmem:[#allocation2] sm:$0xff]
    %22 = vrot.lane.b32.xlu0 %v21, 1
    %v23 = vpop.permute.xlu0 %22
    %24 = vst [vmem:[#allocation5] sm:$0xff] %v23
    // Predicated region
    $region10: #{tpu_custom_call.1} parent=1 // pred_check
      _
    $region11: #{tpu_custom_call.1} parent=1 // pred_check_branch
      %26 = sbr.rel (0) target = $region13
    $region12: #{tpu_custom_call.1} parent=1 // pred_region
      %s28 = ssub.s32 128, 128
      %29 = vsyncadd [#allocation4], %s28
      %s31 = sshll.u32 [#allocation5], 4
      %s32 = int_to_ptr.vmem [resolvable:$true] %s31
      %34 = dma.vmem_to_hbm [thread:$0]  %s32, 128, %s1, [#allocation4]
    $region13: #{tpu_custom_call.1} parent=1 // pred_fallthru
      _
    // Predicated region
    $region14: #{tpu_custom_call.1} parent=1 // pred_check
      _
    $region15: #{tpu_custom_call.1} parent=1 // pred_check_branch
      %36 = sbr.rel (0) target = $region17
    $region16: #{tpu_custom_call.1} parent=1 // pred_region
      %37 = dma.done [#allocation4], 128
    $region17: #{tpu_custom_call.1} parent=1 // pred_fallthru
      _
    %38 = vsyncpa [#allocation3], 1
    %39 = vsyncpa [#allocation4], 1

</llo_original>
